<compile_context>
chip_gen: v5e
topology: v5e:2x2
jax: 0.10.0
libtpu: 0.0.40
codegen_flags: <defaults>
</compile_context>

<pallas_src>
import functools
import math

import jax
import jax.numpy as jnp
from jax.experimental import pallas as pl
from jax.experimental.pallas import tpu as pltpu


def _round_up(x, m):
    return -(-x // m) * m


def _round_down(x, m):
    return (x // m) * m


def _sublane(dtype):
    # Sublane alignment of the second-to-last block dim (f32: 8, bf16: 16, i8: 32).
    return {4: 8, 2: 16, 1: 32}.get(jnp.dtype(dtype).itemsize, 8)


def _vmem_capacity_bytes():
    try:
        cap = getattr(pltpu.get_tpu_info(), "vmem_capacity_bytes", None)
        if cap:
            return int(cap)
    except Exception:
        pass
    return 64 << 20  # conservative (v7x-sized) fallback


def _lora_kernel_bt(x_ref, bt_ref, a_ref, o_ref, *, scaling):
    # bt_ref: (rank, tm) strip of B^T.  Scale the small operand (rank*tm elems)
    # instead of the full (tm, fan_in) delta; contract dim 0 of both operands
    # (natural sublane-contraction layout for the MXU).
    bt = bt_ref[...].astype(jnp.float32) * scaling
    a = a_ref[...].astype(jnp.float32)
    delta = jax.lax.dot_general(bt, a, (((0,), (0,)), ((), ())),
                                preferred_element_type=jnp.float32)
    o_ref[...] = (x_ref[...].astype(jnp.float32) + delta).astype(o_ref.dtype)


def _lora_kernel_b(x_ref, b_ref, a_ref, o_ref, *, scaling):
    # Fallback layout when the strip width is not lane-aligned: b_ref is a
    # (tm, rank) strip of B.  Still scale the small operand.
    b = b_ref[...].astype(jnp.float32) * scaling
    delta = jnp.dot(b, a_ref[...].astype(jnp.float32),
                    preferred_element_type=jnp.float32)
    o_ref[...] = (x_ref[...].astype(jnp.float32) + delta).astype(o_ref.dtype)


def lora_forward(x, lora_b, lora_a, *, lora_alpha=1, target_block_bytes=None,
                 donate_x=False):
    """x: (fan_out, fan_in); lora_b: (fan_out, rank); lora_a: (rank, fan_in)."""
    fan_out, fan_in = x.shape
    rank, fan_in_a = lora_a.shape
    assert fan_in_a == fan_in and lora_b.shape == (fan_out, rank)
    scaling = lora_alpha / rank

    itemsize = jnp.dtype(x.dtype).itemsize
    itemsize_a = jnp.dtype(lora_a.dtype).itemsize
    itemsize_b = jnp.dtype(lora_b.dtype).itemsize
    sublane = max(_sublane(x.dtype), _sublane(lora_b.dtype))

    cap = _vmem_capacity_bytes()
    if target_block_bytes is None:
        # ~8 MiB strips on v7x (64 MiB VMEM), ~16 MiB on v5e/v6e (128 MiB):
        # keeps the ~0.35 us per-grid-step overhead to a few percent of the DMA.
        target_block_bytes = (16 << 20) if cap >= (96 << 20) else (8 << 20)

    fi_p = _round_up(fan_in, 128)  # lane-padded fan_in in VMEM

    # Per-row VMEM cost (conservative): X and O double-buffered, the f32 dot
    # result, an f32 upcast temp when x is sub-32-bit, and lane/sublane-padded
    # B strip buffers (worst case: 4 lanes padded to 128).
    per_row = 4 * fi_p * itemsize + 4 * fi_p
    if itemsize < 4:
        per_row += 4 * fi_p
    per_row += 2 * 128 * itemsize_b
    fixed = 2 * _round_up(rank, _sublane(lora_a.dtype)) * fi_p * itemsize_a + (2 << 20)

    budget = int(cap * 0.70)               # keep the working set well under VMEM
    tm_cap = max(sublane, (budget - fixed) // per_row)

    row_bytes = max(1, fan_in * itemsize)
    rows_target = max(1, target_block_bytes // row_bytes)
    tm = min(rows_target, tm_cap, fan_out)

    if tm >= fan_out:
        # A single strip would leave one v7x TensorCore idle on a pure
        # HBM-streaming op: split into >= 2 strips whenever possible.
        if fan_out >= 2 * sublane:
            half = _round_up(pl.cdiv(fan_out, 2), sublane)
            half128 = _round_up(half, 128)
            tm = half128 if half128 < fan_out else half
        else:
            tm = fan_out
    elif tm >= 128:
        tm = _round_down(tm, 128)           # lane-aligned -> transposed-B layout
    else:
        tm = max(sublane, _round_down(tm, sublane))

    grid_m = pl.cdiv(fan_out, tm)           # partial last strip handled by Pallas

    # Transposed-B layout needs the strip width to be a multiple of 128 (or the
    # full fan_out); otherwise fall back to the (tm, rank) layout.
    use_bt = (tm % 128 == 0) or (tm == fan_out)

    if use_bt:
        b_arg = lora_b.T                     # (rank, fan_out): tiny transpose in HBM
        b_spec = pl.BlockSpec((rank, tm), lambda i: (0, i))
        b_buf_bytes = (2 * _round_up(rank, _sublane(lora_b.dtype))
                       * _round_up(tm, 128) * itemsize_b)
        kernel = functools.partial(_lora_kernel_bt, scaling=scaling)
    else:
        b_arg = lora_b                       # (fan_out, rank)
        b_spec = pl.BlockSpec((tm, rank), lambda i: (i, 0))
        b_buf_bytes = (2 * _round_up(tm, _sublane(lora_b.dtype))
                       * 128 * itemsize_b)
        kernel = functools.partial(_lora_kernel_b, scaling=scaling)

    # VMEM budget: X/O double-buffered + f32 delta (+ upcast temp) + B strips + A.
    vmem_needed = (4 * tm * fi_p * itemsize
                   + tm * fi_p * 4
                   + (tm * fi_p * 4 if itemsize < 4 else 0)
                   + b_buf_bytes
                   + 2 * _round_up(rank, _sublane(lora_a.dtype)) * fi_p * itemsize_a)
    vmem_limit = max(vmem_needed + (4 << 20), 32 << 20)
    vmem_limit = min(vmem_limit, cap * 7 // 8)   # <= ~56 MiB on v7x, ~112 MiB on v5e/v6e

    cost = pl.CostEstimate(
        flops=2 * fan_out * fan_in * rank,
        transcendentals=0,
        bytes_accessed=(2 * fan_out * fan_in * itemsize
                        + fan_out * rank * itemsize_b
                        + rank * fan_in * itemsize_a),
    )

    return pl.pallas_call(
        kernel,
        out_shape=jax.ShapeDtypeStruct((fan_out, fan_in), x.dtype),
        grid_spec=pltpu.PrefetchScalarGridSpec(
            num_scalar_prefetch=0,
            grid=(grid_m,),
            in_specs=[
                pl.BlockSpec((tm, fan_in), lambda i: (i, 0)),    # X row strip
                b_spec,                                           # B strip
                pl.BlockSpec((rank, fan_in), lambda i: (0, 0)),  # A fully resident
            ],
            out_specs=pl.BlockSpec((tm, fan_in), lambda i: (i, 0)),
        ),
        compiler_params=pltpu.CompilerParams(
            dimension_semantics=("parallel",),  # shards strips across TCs (v7x)
            vmem_limit_bytes=int(vmem_limit),
        ),
        cost_estimate=cost,
        # When the caller can donate X (typical parametrized-weight patching),
        # reuse its HBM buffer as the output: halves peak HBM footprint.
        input_output_aliases=({0: 0} if donate_x else {}),
    )(x, b_arg, lora_a)


def _reference(x, lora_b, lora_a, lora_alpha):
    rank = lora_a.shape[0]
    return x + (lora_b @ lora_a).reshape(x.shape) * (lora_alpha / rank)


if __name__ == "__main__":
    key = jax.random.PRNGKey(0)

    # --- Test 1: small shapes consistent with Linear(fan_in=128, fan_out=64), rank=4.
    fan_out, fan_in, rank, lora_alpha = 64, 128, 4, 1
    kx, ka, kb, key = jax.random.split(key, 4)

    x = jax.random.normal(kx, (fan_out, fan_in), dtype=jnp.float32)
    # lora_A: kaiming_uniform_(a=sqrt(5)) -> U(-1/sqrt(fan_in), 1/sqrt(fan_in)).
    bound = 1.0 / math.sqrt(fan_in)
    lora_a = jax.random.uniform(ka, (rank, fan_in), dtype=jnp.float32,
                                minval=-bound, maxval=bound)
    # Module inits lora_B to zeros (delta vanishes); use non-zero B to exercise matmul.
    lora_b = 0.1 * jax.random.normal(kb, (fan_out, rank), dtype=jnp.float32)

    # lora_dropout_p = 0.0 -> dropout_fn is identity (nothing to do).
    # TODO(synk): lora_dropout_p > 0 path (mask * dropout scaling of A) and the
    # fan_in_fan_out=True (embedding) swap path are not implemented.

    out = jax.block_until_ready(lora_forward(x, lora_b, lora_a, lora_alpha=lora_alpha))
    ref = _reference(x, lora_b, lora_a, lora_alpha)
    assert jnp.allclose(out, ref, atol=1e-5, rtol=1e-5), (
        float(jnp.max(jnp.abs(out - ref))))

    # --- Test 2: non-divisible fan_out with a small forced block size so the grid
    # has a partial last strip (exercises the ragged last tile + fallback B layout).
    fan_out2, fan_in2 = 200, 256
    kx2, ka2, kb2, key = jax.random.split(key, 4)
    x2 = jax.random.normal(kx2, (fan_out2, fan_in2), dtype=jnp.float32)
    bound2 = 1.0 / math.sqrt(fan_in2)
    a2 = jax.random.uniform(ka2, (rank, fan_in2), dtype=jnp.float32,
                            minval=-bound2, maxval=bound2)
    b2 = 0.1 * jax.random.normal(kb2, (fan_out2, rank), dtype=jnp.float32)

    out2 = jax.block_until_ready(
        lora_forward(x2, b2, a2, lora_alpha=lora_alpha,
                     target_block_bytes=64 * 1024))  # forces tm=64 -> grid of 4, partial last
    ref2 = _reference(x2, b2, a2, lora_alpha)
    assert jnp.allclose(out2, ref2, atol=1e-5, rtol=1e-5), (
        float(jnp.max(jnp.abs(out2 - ref2))))

    # --- Test 3: lane-aligned split (tm multiple of 128, grid of 2) exercising the
    # transposed-B (rank, tm) layout and the two-strip megacore split.
    fan_out3, fan_in3 = 512, 256
    kx3, ka3, kb3, _ = jax.random.split(key, 4)
    x3 = jax.random.normal(kx3, (fan_out3, fan_in3), dtype=jnp.float32)
    bound3 = 1.0 / math.sqrt(fan_in3)
    a3 = jax.random.uniform(ka3, (rank, fan_in3), dtype=jnp.float32,
                            minval=-bound3, maxval=bound3)
    b3 = 0.1 * jax.random.normal(kb3, (fan_out3, rank), dtype=jnp.float32)

    out3 = jax.block_until_ready(lora_forward(x3, b3, a3, lora_alpha=lora_alpha))
    ref3 = _reference(x3, b3, a3, lora_alpha)
    assert jnp.allclose(out3, ref3, atol=1e-5, rtol=1e-5), (
        float(jnp.max(jnp.abs(out3 - ref3))))

    print("KERNEL_OK")
</pallas_src>

<mosaic_0001>
module attributes {stable_mosaic.version = 11 : i64} {
  func.func @_lora_kernel_b(%arg0: i32, %arg1: memref<32x128xf32, #tpu.memory_space<vmem>>, %arg2: memref<32x4xf32, #tpu.memory_space<vmem>>, %arg3: memref<4x128xf32, #tpu.memory_space<vmem>>, %arg4: memref<32x128xf32, #tpu.memory_space<vmem>>) attributes {dimension_semantics = [#tpu.dimension_semantics<parallel>], iteration_bounds = array<i64: 2>, scalar_prefetch = 0 : i64, scratch_operands = 0 : i64, tpu.core_type = #tpu.core_type<tc>, window_params = [{transform_indices = @transform_0, window_bounds = array<i64: 32, 128>}, {transform_indices = @transform_1, window_bounds = array<i64: 32, 4>}, {pipeline_mode = #tpu.pipeline_mode<synchronous>, transform_indices = @transform_2, window_bounds = array<i64: 4, 128>}, {transform_indices = @transform_3, window_bounds = array<i64: 32, 128>}]} {
    %c0 = arith.constant 0 : index
    %c0_0 = arith.constant 0 : index
    %0 = vector.load %arg2[%c0, %c0_0] : memref<32x4xf32, #tpu.memory_space<vmem>>, vector<32x4xf32>
    %cst = arith.constant 2.500000e-01 : f32
    %1 = vector.broadcast %cst : f32 to vector<32x4xf32>
    %2 = arith.mulf %0, %1 : vector<32x4xf32>
    %c0_1 = arith.constant 0 : index
    %c0_2 = arith.constant 0 : index
    %3 = vector.load %arg3[%c0_1, %c0_2] : memref<4x128xf32, #tpu.memory_space<vmem>>, vector<4x128xf32>
    %cst_3 = arith.constant dense<0.000000e+00> : vector<32x128xf32>
    %4 = tpu.matmul %2, %3, %cst_3 {dimension_numbers = #tpu.dot_dimension_numbers<[1], [0], [0], [1], [0, 0, 1, 1], [], []>} : vector<32x4xf32>, vector<4x128xf32>, vector<32x128xf32> -> vector<32x128xf32>
    %c0_4 = arith.constant 0 : index
    %c0_5 = arith.constant 0 : index
    %5 = vector.load %arg1[%c0_4, %c0_5] : memref<32x128xf32, #tpu.memory_space<vmem>>, vector<32x128xf32>
    %6 = arith.addf %5, %4 : vector<32x128xf32>
    %c0_6 = arith.constant 0 : index
    %c0_7 = arith.constant 0 : index
    %7 = vector.load %arg4[%c0_6, %c0_7] : memref<32x128xf32, #tpu.memory_space<vmem>>, vector<32x128xf32>
    tpu.vector_store %arg4[%c0_6, %c0_7], %6 {strides = array<i32>} : memref<32x128xf32, #tpu.memory_space<vmem>>, vector<32x128xf32>,
    return
  }
  func.func @transform_0(%arg0: i32) -> (i32, i32) {
    %c0_i32 = arith.constant 0 : i32
    %c0_i32_0 = arith.constant 0 : i32
    return %arg0, %c0_i32 : i32, i32
  }
  func.func @transform_1(%arg0: i32) -> (i32, i32) {
    %c0_i32 = arith.constant 0 : i32
    %c0_i32_0 = arith.constant 0 : i32
    return %arg0, %c0_i32 : i32, i32
  }
  func.func @transform_2(%arg0: i32) -> (i32, i32) {
    %c0_i32 = arith.constant 0 : i32
    %c0_i32_0 = arith.constant 0 : i32
    %c0_i32_1 = arith.constant 0 : i32
    return %c0_i32, %c0_i32_0 : i32, i32
  }
  func.func @transform_3(%arg0: i32) -> (i32, i32) {
    %c0_i32 = arith.constant 0 : i32
    %c0_i32_0 = arith.constant 0 : i32
    return %arg0, %c0_i32 : i32, i32
  }
}

</mosaic_0001>

<llo_original>
// kernel: tpu_custom_call.1
$region0: #{tpu_custom_call.1}
  #allocation0 [shape = 'u32[]', space=smem, size = 0x4, offset = 0x4, fixed_abs, tag = 'smem constant byte address 0x4 - core index']
  #allocation1 [shape = 'u32[72,128]{1,0:T(1,128)}', space=vmem, size = 0x9000, scoped, tag = 'internal scratch']
  %s0 = inlined_call_operand.vmem [shape: f32[64,128], index: 0, kind: input, shape index: {}]
  %s1 = inlined_call_operand.vmem [shape: f32[64,4], index: 1, kind: input, shape index: {}]
  %s2 = inlined_call_operand.vmem [shape: f32[4,128], index: 2, kind: input, shape index: {}]
  %s3 = inlined_call_operand.hbm [shape: f32[64,128], index: 3, kind: output, shape index: {}]
  %s4 = sld [smem:[#allocation0]]
  $region45: #{tpu_custom_call.1} parent=0
    _
  %s6 = ssub.s32 1, %s4
  %s7 = scalar_select 0, %s6, %s4
  $region1: #{tpu_custom_call.1} parent=0
    #allocation2 [shape = 'u8[32768]{0}', space=vmem, size = 0x8000, scoped, tag = 'output window, operand 0']
    #allocation3 [shape = 's32[2]{0}', space=sflag, size = 0x8, scoped, tag = 'scoped memory for tpu_custom_call.1']
    %8 = vsyncpa [#allocation3], 0
    %s9 = scalar_lea.sflag [#allocation3], 1
    %10 = vsyncpa %s9, 0
    loop: start=0, step=1, limit=4
    $region2: #{tpu_custom_call.1} parent=1 // loop_pre_header
      _
    $region3: #{tpu_custom_call.1} parent=1 // loop_header
      %s12 = sphi 0, %s16
      %p13 = scmp.ge.s32.totalorder %s12, 4
      %s22 = sphi 0, %s24
      %s25 = sphi 0, %s22
      %s26 = sphi 0, %s25
      %s42 = sphi 0, %s26
      %s48 = sphi 0, %s50
      %s51 = sphi 0, %s48
      %s52 = sphi 0, %s51
      %s68 = sphi 0, %s52
      %s72 = sphi 0, %s72
      %s74 = sphi 0, %s72
      %s75 = sphi 0, %s74
      %s89 = sphi 0, %s75
      %s95 = sphi 0, %s97
      %s98 = sphi 0, %s95
      %s99 = sphi 0, %s98
      %s115 = sphi 0, %s99
    $region4: #{tpu_custom_call.1} parent=1 // loop_header_branch
      %15 = sbr.rel (%p13) target = $region8
    $region5: #{tpu_custom_call.1} parent=1 // loop_body
      %s17 = ssub.s32 %s12, 1
      %s18 = ssub.s32 %s12, 2
      %s19 = sadd.s32 %s12, 1
      %s20 = ssub.s32 %s12, %s19
      %p21 = scmp.eq.s32.totalorder %s20, 0
      %s23 = sadd.s32 %s22, 1
      %s24 = scalar_select %p21, %s22, %s23
      %p27 = pneg %p21
      %p28 = scmp.eq.s32.totalorder %s12, 1
      %p29 = por %p27, %p28
      %p30 = scmp.ne.s32.totalorder %s22, %s25
      %p31 = scmp.eq.s32.totalorder %s12, 0
      %p32 = por %p30, %p31
      %p33 = scmp.ne.s32.totalorder %s22, %s25
      %p34 = scmp.eq.s32.totalorder %s17, 1
      %p35 = por %p33, %p34
      %p36 = scmp.ne.s32.totalorder %s25, %s26
      %p37 = scmp.eq.s32.totalorder %s17, 0
      %p38 = por %p36, %p37
      %p39 = scmp.ne.s32.totalorder %s25, %s26
      %p40 = scmp.eq.s32.totalorder %s18, 1
      %p41 = por %p39, %p40
      %p43 = scmp.ne.s32.totalorder %s26, %s42
      %p44 = scmp.eq.s32.totalorder %s18, 0
      %p45 = por %p43, %p44
      %s46 = ssub.s32 %s12, %s19
      %p47 = scmp.eq.s32.totalorder %s46, 0
      %s49 = sadd.s32 %s48, 1
      %s50 = scalar_select %p47, %s48, %s49
      %p53 = pneg %p47
      %p54 = scmp.eq.s32.totalorder %s12, 1
      %p55 = por %p53, %p54
      %p56 = scmp.ne.s32.totalorder %s48, %s51
      %p57 = scmp.eq.s32.totalorder %s12, 0
      %p58 = por %p56, %p57
      %p59 = scmp.ne.s32.totalorder %s48, %s51
      %p60 = scmp.eq.s32.totalorder %s17, 1
      %p61 = por %p59, %p60
      %p62 = scmp.ne.s32.totalorder %s51, %s52
      %p63 = scmp.eq.s32.totalorder %s17, 0
      %p64 = por %p62, %p63
      %p65 = scmp.ne.s32.totalorder %s51, %s52
      %p66 = scmp.eq.s32.totalorder %s18, 1
      %p67 = por %p65, %p66
      %p69 = scmp.ne.s32.totalorder %s52, %s68
      %p70 = scmp.eq.s32.totalorder %s18, 0
      %p71 = por %p69, %p70
      %s73 = sadd.s32 %s72, 1
      %p76 = scmp.eq.s32.totalorder %s12, 1
      %p77 = scmp.ne.s32.totalorder %s72, %s74
      %p78 = scmp.eq.s32.totalorder %s12, 0
      %p79 = por %p77, %p78
      %p80 = scmp.ne.s32.totalorder %s72, %s74
      %p81 = scmp.eq.s32.totalorder %s17, 1
      %p82 = por %p80, %p81
      %p83 = scmp.ne.s32.totalorder %s74, %s75
      %p84 = scmp.eq.s32.totalorder %s17, 0
      %p85 = por %p83, %p84
      %p86 = scmp.ne.s32.totalorder %s74, %s75
      %p87 = scmp.eq.s32.totalorder %s18, 1
      %p88 = por %p86, %p87
      %p90 = scmp.ne.s32.totalorder %s75, %s89
      %p91 = scmp.eq.s32.totalorder %s18, 0
      %p92 = por %p90, %p91
      %s93 = ssub.s32 %s12, %s19
      %p94 = scmp.eq.s32.totalorder %s93, 0
      %s96 = sadd.s32 %s95, 1
      %s97 = scalar_select %p94, %s95, %s96
      %p100 = pneg %p94
      %p101 = scmp.eq.s32.totalorder %s12, 1
      %p102 = por %p100, %p101
      %p103 = scmp.ne.s32.totalorder %s95, %s98
      %p104 = scmp.eq.s32.totalorder %s12, 0
      %p105 = por %p103, %p104
      %p106 = scmp.ne.s32.totalorder %s95, %s98
      %p107 = scmp.eq.s32.totalorder %s17, 1
      %p108 = por %p106, %p107
      %p109 = scmp.ne.s32.totalorder %s98, %s99
      %p110 = scmp.eq.s32.totalorder %s17, 0
      %p111 = por %p109, %p110
      %p112 = scmp.ne.s32.totalorder %s98, %s99
      %p113 = scmp.eq.s32.totalorder %s18, 1
      %p114 = por %p112, %p113
      %p116 = scmp.ne.s32.totalorder %s99, %s115
      %p117 = scmp.eq.s32.totalorder %s18, 0
      %p118 = por %p116, %p117
      %p119 = scmp.le.s32.totalorder 1, %s12
      %p120 = scmp.lt.s32.totalorder %s12, 3
      %p121 = pnand %p119, %p120
      %p122 = pneg %p121
      // Predicated region
      $region9: #{tpu_custom_call.1} parent=5 // pred_check
        _
      $region10: #{tpu_custom_call.1} parent=5 // pred_check_branch
        %124 = sbr.rel (%p121) target = $region12
      $region11: #{tpu_custom_call.1} parent=5 // pred_region
        %s125 = ssub.s32 %s12, 1
        // Predicated region
        $region13: #{tpu_custom_call.1} parent=11 // pred_check
          %p126 = pneg %p85
        $region14: #{tpu_custom_call.1} parent=11 // pred_check_branch
          %128 = sbr.rel (%p126) target = $region16
        $region15: #{tpu_custom_call.1} parent=11 // pred_region
          _
        $region16: #{tpu_custom_call.1} parent=11 // pred_fallthru
          _
      $region12: #{tpu_custom_call.1} parent=5 // pred_fallthru
        _
      %p129 = scmp.lt.s32.totalorder %s12, 2
      // Predicated region
      $region17: #{tpu_custom_call.1} parent=5 // pred_check
        %p130 = pneg %p129
      $region18: #{tpu_custom_call.1} parent=5 // pred_check_branch
        %132 = sbr.rel (%p130) target = $region20
      $region19: #{tpu_custom_call.1} parent=5 // pred_region
        // Predicated region
        $region21: #{tpu_custom_call.1} parent=19 // pred_check
          %p133 = pneg %p32
        $region22: #{tpu_custom_call.1} parent=19 // pred_check_branch
          %135 = sbr.rel (%p133) target = $region24
        $region23: #{tpu_custom_call.1} parent=19 // pred_region
          %s136 = smul.u32 4, %s12
          %p137 = scmp.lt.s32.totalorder %s136, 7
          %s138 = scalar_select %p137, %s136, 7
          %s139 = smul.addr %s138, 8
          %s140 = scalar_lea.vmem %s0, %s139
          %s141 = smul.u32 4, %s12
        $region24: #{tpu_custom_call.1} parent=19 // pred_fallthru
          _
        // Predicated region
        $region25: #{tpu_custom_call.1} parent=19 // pred_check
          %p142 = pneg %p58
        $region26: #{tpu_custom_call.1} parent=19 // pred_check_branch
          %144 = sbr.rel (%p142) target = $region28
        $region27: #{tpu_custom_call.1} parent=19 // pred_region
          %s145 = smul.u32 4, %s12
          %p146 = scmp.lt.s32.totalorder %s145, 7
          %s147 = scalar_select %p146, %s145, 7
          %s148 = smul.addr %s147, 8
          %s149 = scalar_lea.vmem %s1, %s148
          %s150 = smul.u32 4, %s12
        $region28: #{tpu_custom_call.1} parent=19 // pred_fallthru
          _
      $region20: #{tpu_custom_call.1} parent=5 // pred_fallthru
        _
      %p151 = scmp.le.s32.totalorder 1, %s12
      %p152 = scmp.lt.s32.totalorder %s12, 3
      %p153 = pnand %p151, %p152
      %p154 = pneg %p153
      // Predicated region
      $region29: #{tpu_custom_call.1} parent=5 // pred_check
        _
      $region30: #{tpu_custom_call.1} parent=5 // pred_check_branch
        %156 = sbr.rel (%p153) target = $region32
      $region31: #{tpu_custom_call.1} parent=5 // pred_region
        %s157 = ssub.s32 %s12, 1
        %s158 = smul.u32 4, %s17
        %p159 = scmp.lt.s32.totalorder %s158, 7
        %s160 = scalar_select %p159, %s158, 7
        %s161 = smul.addr %s160, 8
        %s162 = scalar_lea.vmem %s0, %s161
        %p163 = pneg %p38
        %p164 = pneg %p35
        %s165 = smul.u32 4, %s17
        %p166 = scmp.lt.s32.totalorder %s165, 7
        %s167 = scalar_select %p166, %s165, 7
        %s168 = smul.addr %s167, 8
        %s169 = scalar_lea.vmem %s1, %s168
        %p170 = pneg %p64
        %p171 = pneg %p61
        %p172 = pneg %p85
        %p173 = pneg %p82
        %p174 = pneg %p111
        %p175 = pneg %p108
        %s176 = sand.u32 %s98, 1
        %s177 = scalar_lea.sflag [#allocation3], %s176
        %s178 = sand.u32 %s98, 1
        %s179 = smul.addr %s178, 32
        %s180 = scalar_lea.vmem [#allocation2], %s179
        %s181 = smul.u32 4, %s17
        %p182 = scmp.lt.s32.totalorder %s181, 7
        %s183 = scalar_select %p182, %s181, 7
        %s184 = smul.addr %s183, 8
        %s185 = scalar_lea.vmem %s0, %s184
        %s186 = smul.u32 4, %s17
        %s187 = smul.u32 4, %s17
        %p188 = scmp.lt.s32.totalorder %s187, 7
        %s189 = scalar_select %p188, %s187, 7
        %s190 = smul.addr %s189, 8
        %s191 = scalar_lea.vmem %s1, %s190
        %s192 = smul.u32 4, %s17
        %s193 = smul.u32 4, %s17
        %v194 = vld [vmem:[%s191] sm:$0xff]
        %v195 = vld [vmem:[%s191 + $0x8] sm:$0xff]
        %v196 = vld [vmem:[%s191 + $0x10] sm:$0xff]
        %v197 = vld [vmem:[%s191 + $0x18] sm:$0xff]
        %v198 = vmul.f32 %v194, 0.25
        %v199 = vmul.f32 %v195, 0.25
        %v200 = vmul.f32 %v196, 0.25
        %v201 = vmul.f32 %v197, 0.25
        %v202 = vld [vmem:[%s2] sm:$0xf]
        %vm203 = vcmask 31744
        %v205 = vsel %vm203, %v198, 0
        %v208 = vsel %vm203, %v199, 0
        %v211 = vsel %vm203, %v200, 0
        %v214 = vsel %vm203, %v201, 0
        %vm216 = vcmask 1043456
        %v218 = vsel %vm216, %v202, 0
        %220 = vmatpush.msra.mxu0 0.0
        %221 = vmatpush.msra.mxu0 0.0
        %222 = vmatpush.msra.mxu0 0.0
        %223 = vmatpush.msra.mxu0 0.0
        %224 = vmatpush.msra.mxu0 0.0
        %225 = vmatpush.msra.mxu0 0.0
        %226 = vmatpush.msra.mxu0 0.0
        %227 = vmatpush.msra.mxu0 0.0
        %228 = vmatpush.msra.mxu0 0.0
        %229 = vmatpush.msra.mxu0 0.0
        %230 = vmatpush.msra.mxu0 0.0
        %231 = vmatpush.msra.mxu0 0.0
        %232 = vmatpush.msra.mxu0 0.0
        %233 = vmatpush.msra.mxu0 0.0
        %234 = vmatpush.msra.mxu0 0.0
        %235 = vmatpush.msra.mxu0 %v218
        %236 = vmatmul.f32.gmra.mxu0 %v205
        %v237 = vpop.f32.mrf.mxu0
        %v238 = vadd.f32 0.0, %v237
        %239 = vmatmul.f32.gmra.mxu0 %v208
        %v240 = vpop.f32.mrf.mxu0
        %v241 = vadd.f32 0.0, %v240
        %242 = vmatmul.f32.gmra.mxu0 %v211
        %v243 = vpop.f32.mrf.mxu0
        %v244 = vadd.f32 0.0, %v243
        %245 = vmatmul.f32.gmra.mxu0 %v214
        %v246 = vpop.f32.mrf.mxu0
        %v247 = vadd.f32 0.0, %v246
        %248 = vdwg.mxu0
        %v249 = vld [vmem:[%s185] sm:$0xff]
        %v250 = vld [vmem:[%s185 + $0x8] sm:$0xff]
        %v251 = vld [vmem:[%s185 + $0x10] sm:$0xff]
        %v252 = vld [vmem:[%s185 + $0x18] sm:$0xff]
        %v253 = vadd.f32 %v249, %v238
        %v254 = vadd.f32 %v250, %v241
        %v255 = vadd.f32 %v251, %v244
        %v256 = vadd.f32 %v252, %v247
        %257 = vst [vmem:[%s180] sm:$0xff] %v253
        %258 = vst [vmem:[%s180 + $0x8] sm:$0xff] %v254
        %259 = vst [vmem:[%s180 + $0x10] sm:$0xff] %v255
        %260 = vst [vmem:[%s180 + $0x18] sm:$0xff] %v256
        %s261 = sand.u32 %s98, 1
        %s262 = scalar_lea.sflag [#allocation3], %s261
        %s263 = sand.u32 %s98, 1
        %s264 = smul.addr %s263, 32
        %s265 = scalar_lea.vmem [#allocation2], %s264
        // Predicated region
        $region33: #{tpu_custom_call.1} parent=31 // pred_check
          %p266 = pneg %p108
        $region34: #{tpu_custom_call.1} parent=31 // pred_check_branch
          %268 = sbr.rel (%p266) target = $region36
        $region35: #{tpu_custom_call.1} parent=31 // pred_region
          %s269 = smul.u32 4, %s17
          %271 = vsyncadd %s262, 0
          %s272 = smul.addr %s269, 8
          %s273 = scalar_lea.hbm %s3, %s272
          %s274 = sshll.u32 %s265, 4
          %s275 = int_to_ptr.vmem [resolvable:$true] %s274
          %s276 = sshll.u32 %s273, 4
          %s277 = int_to_ptr.hbm [resolvable:$true] %s276
          %282 = dma.vmem_to_hbm [thread:$0]  %s275, 512, %s277, %s262, 128, 128, 8
        $region36: #{tpu_custom_call.1} parent=31 // pred_fallthru
          _
      $region32: #{tpu_custom_call.1} parent=5 // pred_fallthru
        _
      %p283 = scmp.le.s32.totalorder 2, %s12
      // Predicated region
      $region37: #{tpu_custom_call.1} parent=5 // pred_check
        %p284 = pneg %p283
      $region38: #{tpu_custom_call.1} parent=5 // pred_check_branch
        %286 = sbr.rel (%p284) target = $region40
      $region39: #{tpu_custom_call.1} parent=5 // pred_region
        %s287 = ssub.s32 %s12, 2
        // Predicated region
        $region41: #{tpu_custom_call.1} parent=39 // pred_check
          %p288 = pneg %p114
        $region42: #{tpu_custom_call.1} parent=39 // pred_check_branch
          %290 = sbr.rel (%p288) target = $region44
        $region43: #{tpu_custom_call.1} parent=39 // pred_region
          %s291 = sand.u32 %s99, 1
          %s292 = scalar_lea.sflag [#allocation3], %s291
          %s293 = sand.u32 %s99, 1
          %s294 = smul.addr %s293, 32
          %s295 = scalar_lea.vmem [#allocation2], %s294
          %297 = dma.done %s292, 512
        $region44: #{tpu_custom_call.1} parent=39 // pred_fallthru
          _
      $region40: #{tpu_custom_call.1} parent=5 // pred_fallthru
        _
    $region6: #{tpu_custom_call.1} parent=1 // loop_footer
      %s16 = sadd.s32 1, %s12
    $region7: #{tpu_custom_call.1} parent=1 // loop_footer_branch
      %11 = sbr.rel target = $region3
    $region8: #{tpu_custom_call.1} parent=1 // loop_exit
      _
    %298 = vsyncpa [#allocation3], 1
    %s299 = scalar_lea.sflag [#allocation3], 1
    %300 = vsyncpa %s299, 1

</llo_original>
